<compile_context>
chip_gen: v5e
topology: v5e:2x2
jax: 0.10.0
libtpu: 0.0.40
codegen_flags: <defaults>
</compile_context>

<pallas_src>
import jax
import jax.numpy as jnp
from jax.experimental import pallas as pl
from jax.experimental.pallas import tpu as pltpu

HIDDEN = 128
NUM_CLASSES = 2
CLS_PAD = 128          # padded class dim -> lane-dense fc2 + output store
LANE = 128
SUBLANE = 8
MAX_TB = 512           # batch tile upper bound (sweepable)
PIPE_BUDGET_BYTES = 12 * 1024 * 1024   # pipelined (x + out) buffer budget


def _round_up(n, m):
    return ((n + m - 1) // m) * m


def _pick_batch_tile(B, Dp):
    """Largest batch tile (multiple of 8, <= MAX_TB) whose double-buffered
    x (bf16) + out (f32) tiles fit in the pipeline VMEM budget."""
    per_row = 2 * (Dp * 2) + 2 * (CLS_PAD * 4)      # 2 bufs each
    tb = (PIPE_BUDGET_BYTES // per_row) // SUBLANE * SUBLANE
    tb = max(SUBLANE, tb)
    return min(tb, MAX_TB, _round_up(B, SUBLANE))


def _mlp_kernel(x_ref, w1_ref, b1_ref, w2_ref, b2_ref, o_ref):
    # fc1: (TB, Dp) bf16 @ (Dp, 128) bf16 -> f32 accumulation on the MXU.
    h = jnp.dot(x_ref[...], w1_ref[...], preferred_element_type=jnp.float32)
    # bias add + ReLU stay in f32 on the VPU (cheap next to MXU/DMA).
    h = jnp.maximum(h + b1_ref[...], 0.0)
    # fc2: (TB, 128) @ (128, 128 padded classes) -> f32, lane-dense store.
    y = jnp.dot(h.astype(w2_ref.dtype), w2_ref[...],
                preferred_element_type=jnp.float32)
    o_ref[...] = (y + b2_ref[...]).astype(o_ref.dtype)


def email_classifier_forward(x, w1, b1, w2, b2):
    """x: (B, D) f32; w1: (D, 128); b1: (128,); w2: (128, 2); b2: (2,)."""
    B, D = x.shape

    # ---- wrapper-side padding / dtype prep --------------------------------
    Dp = _round_up(D, LANE)                      # lane-dense contraction dim
    TB = _pick_batch_tile(B, Dp)                 # batch tile (multiple of 8)
    Bp = _round_up(B, TB)                        # padded batch

    x_p = jnp.pad(x.astype(jnp.bfloat16), ((0, Bp - B), (0, Dp - D)))
    w1_p = jnp.pad(w1.astype(jnp.bfloat16), ((0, Dp - D), (0, 0)))
    b1_2d = b1.reshape(1, HIDDEN).astype(jnp.float32)
    # zero-pad classes 2 -> 128 so padded lanes contribute exactly zero
    w2_p = jnp.pad(w2.astype(jnp.bfloat16),
                   ((0, 0), (0, CLS_PAD - NUM_CLASSES)))
    b2_p = jnp.pad(b2.reshape(1, NUM_CLASSES).astype(jnp.float32),
                   ((0, 0), (0, CLS_PAD - NUM_CLASSES)))
    # TODO(synk): on v7x, fp8 weight quantization for w1 would halve HBM
    # traffic again; kept bf16 here for portability across v5e/v6e/v7x.

    grid = (Bp // TB,)

    cost = pl.CostEstimate(
        flops=2 * Bp * Dp * HIDDEN + 2 * Bp * HIDDEN * CLS_PAD,
        transcendentals=0,
        bytes_accessed=(x_p.size * 2 + w1_p.size * 2 + w2_p.size * 2
                        + HIDDEN * 4 + CLS_PAD * 4 + Bp * CLS_PAD * 4),
    )

    out_p = pl.pallas_call(
        _mlp_kernel,
        out_shape=jax.ShapeDtypeStruct((Bp, CLS_PAD), jnp.float32),
        grid=grid,
        in_specs=[
            pl.BlockSpec((TB, Dp), lambda i: (i, 0)),           # x: pipelined
            pl.BlockSpec((Dp, HIDDEN), lambda i: (0, 0)),       # w1: resident
            pl.BlockSpec((1, HIDDEN), lambda i: (0, 0)),        # b1: resident
            pl.BlockSpec((HIDDEN, CLS_PAD), lambda i: (0, 0)),  # w2: resident
            pl.BlockSpec((1, CLS_PAD), lambda i: (0, 0)),       # b2: resident
        ],
        out_specs=pl.BlockSpec((TB, CLS_PAD), lambda i: (i, 0)),
        compiler_params=pltpu.CompilerParams(
            dimension_semantics=("parallel",),
        ),
        cost_estimate=cost,
    )(x_p, w1_p, b1_2d, w2_p, b2_p)

    # strip batch + class padding outside the kernel
    return out_p[:B, :NUM_CLASSES]


def init_params(key, input_size):
    """Deterministic init mimicking torch.nn.Linear defaults:
    U(-1/sqrt(fan_in), 1/sqrt(fan_in)) for both weights and biases."""
    k1, k2, k3, k4 = jax.random.split(key, 4)
    bound1 = 1.0 / (input_size ** 0.5)
    bound2 = 1.0 / (HIDDEN ** 0.5)
    # stored as (in_features, out_features) == torch weight transposed
    w1 = jax.random.uniform(k1, (input_size, HIDDEN), jnp.float32, -bound1, bound1)
    b1 = jax.random.uniform(k2, (HIDDEN,), jnp.float32, -bound1, bound1)
    w2 = jax.random.uniform(k3, (HIDDEN, NUM_CLASSES), jnp.float32, -bound2, bound2)
    b2 = jax.random.uniform(k4, (NUM_CLASSES,), jnp.float32, -bound2, bound2)
    return w1, b1, w2, b2


def reference_forward(x, w1, b1, w2, b2):
    h = jnp.maximum(x @ w1 + b1, 0.0)
    return h @ w2 + b2


if __name__ == "__main__":
    key = jax.random.PRNGKey(0)
    fwd = jax.jit(email_classifier_forward)

    # Case 1: aligned small shapes (batch=8, vocab stand-in=512).
    # Case 2: ragged shapes to exercise the batch / feature padding path.
    for (B, D) in [(8, 512), (10, 500)]:
        kx, kp = jax.random.split(jax.random.fold_in(key, D))
        x = jax.random.uniform(kx, (B, D), jnp.float32)  # count-vector-like
        w1, b1, w2, b2 = init_params(kp, D)

        out = fwd(x, w1, b1, w2, b2)
        out = jax.block_until_ready(out)

        ref = reference_forward(x, w1, b1, w2, b2)
        assert out.shape == (B, NUM_CLASSES)
        # bf16 matmul operands (f32 accumulation) -> loosen tolerance a bit
        assert jnp.allclose(out, ref, atol=1e-2, rtol=2e-2), \
            f"mismatch vs reference for B={B}, D={D}"

    print("KERNEL_OK")
</pallas_src>

<mosaic_0001>
module attributes {stable_mosaic.version = 11 : i64} {
  func.func @_mlp_kernel(%arg0: i32, %arg1: memref<8x512xbf16, #tpu.memory_space<vmem>>, %arg2: memref<512x128xbf16, #tpu.memory_space<vmem>>, %arg3: memref<1x128xf32, #tpu.memory_space<vmem>>, %arg4: memref<128x128xbf16, #tpu.memory_space<vmem>>, %arg5: memref<1x128xf32, #tpu.memory_space<vmem>>, %arg6: memref<8x128xf32, #tpu.memory_space<vmem>>) attributes {dimension_semantics = [#tpu.dimension_semantics<parallel>], iteration_bounds = array<i64: 1>, scalar_prefetch = 0 : i64, scratch_operands = 0 : i64, tpu.core_type = #tpu.core_type<tc>, window_params = [{transform_indices = @transform_0, window_bounds = array<i64: 8, 512>}, {pipeline_mode = #tpu.pipeline_mode<synchronous>, transform_indices = @transform_1, window_bounds = array<i64: 512, 128>}, {pipeline_mode = #tpu.pipeline_mode<synchronous>, transform_indices = @transform_2, window_bounds = array<i64: 1, 128>}, {pipeline_mode = #tpu.pipeline_mode<synchronous>, transform_indices = @transform_3, window_bounds = array<i64: 128, 128>}, {pipeline_mode = #tpu.pipeline_mode<synchronous>, transform_indices = @transform_4, window_bounds = array<i64: 1, 128>}, {transform_indices = @transform_5, window_bounds = array<i64: 8, 128>}]} {
    %c0 = arith.constant 0 : index
    %c0_0 = arith.constant 0 : index
    %0 = vector.load %arg1[%c0, %c0_0] : memref<8x512xbf16, #tpu.memory_space<vmem>>, vector<8x512xbf16>
    %c0_1 = arith.constant 0 : index
    %c0_2 = arith.constant 0 : index
    %1 = vector.load %arg2[%c0_1, %c0_2] : memref<512x128xbf16, #tpu.memory_space<vmem>>, vector<512x128xbf16>
    %cst = arith.constant dense<0.000000e+00> : vector<8x128xf32>
    %2 = tpu.matmul %0, %1, %cst {dimension_numbers = #tpu.dot_dimension_numbers<[1], [0], [0], [1], [0, 0, 1, 1], [], []>} : vector<8x512xbf16>, vector<512x128xbf16>, vector<8x128xf32> -> vector<8x128xf32>
    %c0_3 = arith.constant 0 : index
    %c0_4 = arith.constant 0 : index
    %3 = vector.load %arg3[%c0_3, %c0_4] : memref<1x128xf32, #tpu.memory_space<vmem>>, vector<1x128xf32>
    %4 = vector.broadcast %3 : vector<1x128xf32> to vector<8x128xf32>
    %5 = arith.addf %2, %4 : vector<8x128xf32>
    %cst_5 = arith.constant 0.000000e+00 : f32
    %6 = vector.broadcast %cst_5 : f32 to vector<8x128xf32>
    %7 = arith.maximumf %5, %6 : vector<8x128xf32>
    %8 = arith.truncf %7 : vector<8x128xf32> to vector<8x128xbf16>
    %c0_6 = arith.constant 0 : index
    %c0_7 = arith.constant 0 : index
    %9 = vector.load %arg4[%c0_6, %c0_7] : memref<128x128xbf16, #tpu.memory_space<vmem>>, vector<128x128xbf16>
    %cst_8 = arith.constant dense<0.000000e+00> : vector<8x128xf32>
    %10 = tpu.matmul %8, %9, %cst_8 {dimension_numbers = #tpu.dot_dimension_numbers<[1], [0], [0], [1], [0, 0, 1, 1], [], []>} : vector<8x128xbf16>, vector<128x128xbf16>, vector<8x128xf32> -> vector<8x128xf32>
    %c0_9 = arith.constant 0 : index
    %c0_10 = arith.constant 0 : index
    %11 = vector.load %arg5[%c0_9, %c0_10] : memref<1x128xf32, #tpu.memory_space<vmem>>, vector<1x128xf32>
    %12 = vector.broadcast %11 : vector<1x128xf32> to vector<8x128xf32>
    %13 = arith.addf %10, %12 : vector<8x128xf32>
    %c0_11 = arith.constant 0 : index
    %c0_12 = arith.constant 0 : index
    %14 = vector.load %arg6[%c0_11, %c0_12] : memref<8x128xf32, #tpu.memory_space<vmem>>, vector<8x128xf32>
    tpu.vector_store %arg6[%c0_11, %c0_12], %13 {strides = array<i32>} : memref<8x128xf32, #tpu.memory_space<vmem>>, vector<8x128xf32>,
    return
  }
  func.func @transform_0(%arg0: i32) -> (i32, i32) {
    %c0_i32 = arith.constant 0 : i32
    %c0_i32_0 = arith.constant 0 : i32
    return %arg0, %c0_i32 : i32, i32
  }
  func.func @transform_1(%arg0: i32) -> (i32, i32) {
    %c0_i32 = arith.constant 0 : i32
    %c0_i32_0 = arith.constant 0 : i32
    %c0_i32_1 = arith.constant 0 : i32
    return %c0_i32, %c0_i32_0 : i32, i32
  }
  func.func @transform_2(%arg0: i32) -> (i32, i32) {
    %c0_i32 = arith.constant 0 : i32
    %c0_i32_0 = arith.constant 0 : i32
    %c0_i32_1 = arith.constant 0 : i32
    return %c0_i32, %c0_i32_0 : i32, i32
  }
  func.func @transform_3(%arg0: i32) -> (i32, i32) {
    %c0_i32 = arith.constant 0 : i32
    %c0_i32_0 = arith.constant 0 : i32
    %c0_i32_1 = arith.constant 0 : i32
    return %c0_i32, %c0_i32_0 : i32, i32
  }
  func.func @transform_4(%arg0: i32) -> (i32, i32) {
    %c0_i32 = arith.constant 0 : i32
    %c0_i32_0 = arith.constant 0 : i32
    %c0_i32_1 = arith.constant 0 : i32
    return %c0_i32, %c0_i32_0 : i32, i32
  }
  func.func @transform_5(%arg0: i32) -> (i32, i32) {
    %c0_i32 = arith.constant 0 : i32
    %c0_i32_0 = arith.constant 0 : i32
    return %arg0, %c0_i32 : i32, i32
  }
}

</mosaic_0001>

<llo_original>
// kernel: email_classifier_forward.1
$region0: #{email_classifier_forward.1}
  #allocation0 [shape = 'u32[]', space=smem, size = 0x4, offset = 0x4, fixed_abs, tag = 'smem constant byte address 0x4 - core index']
  #allocation1 [shape = 'u32[72,128]{1,0:T(1,128)}', space=vmem, size = 0x9000, scoped, tag = 'internal scratch']
  %s0 = inlined_call_operand.vmem [shape: bf16[8,512], index: 0, kind: input, shape index: {}]
  %s1 = inlined_call_operand.vmem [shape: bf16[512,128], index: 1, kind: input, shape index: {}]
  %s2 = inlined_call_operand.vmem [shape: f32[1,128], index: 2, kind: input, shape index: {}]
  %s3 = inlined_call_operand.vmem [shape: bf16[128,128], index: 3, kind: input, shape index: {}]
  %s4 = inlined_call_operand.vmem [shape: f32[1,128], index: 4, kind: input, shape index: {}]
  %s5 = inlined_call_operand.vmem [shape: f32[8,128], index: 5, kind: output, shape index: {}]
  %s6 = sld [smem:[#allocation0]]
  $region30: #{email_classifier_forward.1} parent=0
    _
  %s8 = ssub.s32 1, %s6
  %s9 = scalar_select 0, %s8, %s6
  // Predicated region
  $region2: #{email_classifier_forward.1} parent=0 // pred_check
    _
  $region3: #{email_classifier_forward.1} parent=0 // pred_check_branch
    %11 = sbr.rel (0) target = $region5
  $region4: #{email_classifier_forward.1} parent=0 // pred_region
    _
  $region5: #{email_classifier_forward.1} parent=0 // pred_fallthru
    _
  // Predicated region
  $region6: #{email_classifier_forward.1} parent=0 // pred_check
    _
  $region7: #{email_classifier_forward.1} parent=0 // pred_check_branch
    %13 = sbr.rel (0) target = $region9
  $region8: #{email_classifier_forward.1} parent=0 // pred_region
    _
  $region9: #{email_classifier_forward.1} parent=0 // pred_fallthru
    _
  // Predicated region
  $region10: #{email_classifier_forward.1} parent=0 // pred_check
    _
  $region11: #{email_classifier_forward.1} parent=0 // pred_check_branch
    %15 = sbr.rel (0) target = $region13
  $region12: #{email_classifier_forward.1} parent=0 // pred_region
    _
  $region13: #{email_classifier_forward.1} parent=0 // pred_fallthru
    _
  // Predicated region
  $region14: #{email_classifier_forward.1} parent=0 // pred_check
    _
  $region15: #{email_classifier_forward.1} parent=0 // pred_check_branch
    %17 = sbr.rel (0) target = $region17
  $region16: #{email_classifier_forward.1} parent=0 // pred_region
    _
  $region17: #{email_classifier_forward.1} parent=0 // pred_fallthru
    _
  // Predicated region
  $region18: #{email_classifier_forward.1} parent=0 // pred_check
    _
  $region19: #{email_classifier_forward.1} parent=0 // pred_check_branch
    %19 = sbr.rel (0) target = $region21
  $region20: #{email_classifier_forward.1} parent=0 // pred_region
    _
  $region21: #{email_classifier_forward.1} parent=0 // pred_fallthru
    _
  %v20 = vld [vmem:[%s0] sm:$0xff]
  %v21 = vld [vmem:[%s0 + $0x8] sm:$0xff]
  %v22 = vld [vmem:[%s1] sm:$0xf]
  %v23 = vld [vmem:[%s1 + $0x4] sm:$0xf]
  %v24 = vld [vmem:[%s1 + $0x8] sm:$0xf]
  %v25 = vld [vmem:[%s1 + $0xc] sm:$0xf]
  %v26 = vld [vmem:[%s1 + $0x10] sm:$0xf]
  %v27 = vld [vmem:[%s1 + $0x14] sm:$0xf]
  %v28 = vld [vmem:[%s1 + $0x18] sm:$0xf]
  %v29 = vld [vmem:[%s1 + $0x1c] sm:$0xf]
  %v30 = vld [vmem:[%s1 + $0x20] sm:$0xf]
  %v31 = vld [vmem:[%s1 + $0x24] sm:$0xf]
  %v32 = vld [vmem:[%s1 + $0x28] sm:$0xf]
  %v33 = vld [vmem:[%s1 + $0x2c] sm:$0xf]
  %v34 = vld [vmem:[%s1 + $0x30] sm:$0xf]
  %v35 = vld [vmem:[%s1 + $0x34] sm:$0xf]
  %v36 = vld [vmem:[%s1 + $0x38] sm:$0xf]
  %v37 = vld [vmem:[%s1 + $0x3c] sm:$0xf]
  %v38 = vld [vmem:[%s1 + $0x40] sm:$0xf]
  %v39 = vld [vmem:[%s1 + $0x44] sm:$0xf]
  %v40 = vld [vmem:[%s1 + $0x48] sm:$0xf]
  %v41 = vld [vmem:[%s1 + $0x4c] sm:$0xf]
  %v42 = vld [vmem:[%s1 + $0x50] sm:$0xf]
  %v43 = vld [vmem:[%s1 + $0x54] sm:$0xf]
  %v44 = vld [vmem:[%s1 + $0x58] sm:$0xf]
  %v45 = vld [vmem:[%s1 + $0x5c] sm:$0xf]
  %v46 = vld [vmem:[%s1 + $0x60] sm:$0xf]
  %v47 = vld [vmem:[%s1 + $0x64] sm:$0xf]
  %v48 = vld [vmem:[%s1 + $0x68] sm:$0xf]
  %v49 = vld [vmem:[%s1 + $0x6c] sm:$0xf]
  %v50 = vld [vmem:[%s1 + $0x70] sm:$0xf]
  %v51 = vld [vmem:[%s1 + $0x74] sm:$0xf]
  %v52 = vld [vmem:[%s1 + $0x78] sm:$0xf]
  %v53 = vld [vmem:[%s1 + $0x7c] sm:$0xf]
  %v54 = vld [vmem:[%s1 + $0x80] sm:$0xf]
  %v55 = vld [vmem:[%s1 + $0x84] sm:$0xf]
  %v56 = vld [vmem:[%s1 + $0x88] sm:$0xf]
  %v57 = vld [vmem:[%s1 + $0x8c] sm:$0xf]
  %v58 = vld [vmem:[%s1 + $0x90] sm:$0xf]
  %v59 = vld [vmem:[%s1 + $0x94] sm:$0xf]
  %v60 = vld [vmem:[%s1 + $0x98] sm:$0xf]
  %v61 = vld [vmem:[%s1 + $0x9c] sm:$0xf]
  %v62 = vld [vmem:[%s1 + $0xa0] sm:$0xf]
  %v63 = vld [vmem:[%s1 + $0xa4] sm:$0xf]
  %v64 = vld [vmem:[%s1 + $0xa8] sm:$0xf]
  %v65 = vld [vmem:[%s1 + $0xac] sm:$0xf]
  %v66 = vld [vmem:[%s1 + $0xb0] sm:$0xf]
  %v67 = vld [vmem:[%s1 + $0xb4] sm:$0xf]
  %v68 = vld [vmem:[%s1 + $0xb8] sm:$0xf]
  %v69 = vld [vmem:[%s1 + $0xbc] sm:$0xf]
  %v70 = vld [vmem:[%s1 + $0xc0] sm:$0xf]
  %v71 = vld [vmem:[%s1 + $0xc4] sm:$0xf]
  %v72 = vld [vmem:[%s1 + $0xc8] sm:$0xf]
  %v73 = vld [vmem:[%s1 + $0xcc] sm:$0xf]
  %v74 = vld [vmem:[%s1 + $0xd0] sm:$0xf]
  %v75 = vld [vmem:[%s1 + $0xd4] sm:$0xf]
  %v76 = vld [vmem:[%s1 + $0xd8] sm:$0xf]
  %v77 = vld [vmem:[%s1 + $0xdc] sm:$0xf]
  %v78 = vld [vmem:[%s1 + $0xe0] sm:$0xf]
  %v79 = vld [vmem:[%s1 + $0xe4] sm:$0xf]
  %v80 = vld [vmem:[%s1 + $0xe8] sm:$0xf]
  %v81 = vld [vmem:[%s1 + $0xec] sm:$0xf]
  %v82 = vld [vmem:[%s1 + $0xf0] sm:$0xf]
  %v83 = vld [vmem:[%s1 + $0xf4] sm:$0xf]
  %v84 = vld [vmem:[%s1 + $0xf8] sm:$0xf]
  %v85 = vld [vmem:[%s1 + $0xfc] sm:$0xf]
  %v86 = vld [vmem:[%s2] sm:$0x1]
  %v88 = vperm.slane %v86, 0
  %v92 = vunpack.c.l.b16 %v20
  %v93 = vunpack.c.h.b16 %v20
  %v94 = vunpack.c.l.b16 %v21
  %v95 = vunpack.c.h.b16 %v21
  %v96 = vpack.c.b16 %v92, %v92
  %v97 = vpack.c.b16 %v93, %v93
  %v98 = vpack.c.b16 %v94, %v94
  %v99 = vpack.c.b16 %v95, %v95
  %v168 = vunpack.c.l.b16 %v22
  %v169 = vunpack.c.l.b16 %v23
  %v170 = vunpack.c.l.b16 %v24
  %v171 = vunpack.c.l.b16 %v25
  %v172 = vunpack.c.l.b16 %v26
  %v173 = vunpack.c.l.b16 %v27
  %v174 = vunpack.c.l.b16 %v28
  %v175 = vunpack.c.l.b16 %v29
  %v176 = vunpack.c.l.b16 %v30
  %v177 = vunpack.c.l.b16 %v31
  %v178 = vunpack.c.l.b16 %v32
  %v179 = vunpack.c.l.b16 %v33
  %v180 = vunpack.c.l.b16 %v34
  %v181 = vunpack.c.l.b16 %v35
  %v182 = vunpack.c.l.b16 %v36
  %v183 = vunpack.c.l.b16 %v37
  %v184 = vunpack.c.l.b16 %v38
  %v185 = vunpack.c.l.b16 %v39
  %v186 = vunpack.c.l.b16 %v40
  %v187 = vunpack.c.l.b16 %v41
  %v188 = vunpack.c.l.b16 %v42
  %v189 = vunpack.c.l.b16 %v43
  %v190 = vunpack.c.l.b16 %v44
  %v191 = vunpack.c.l.b16 %v45
  %v192 = vunpack.c.l.b16 %v46
  %v193 = vunpack.c.l.b16 %v47
  %v194 = vunpack.c.l.b16 %v48
  %v195 = vunpack.c.l.b16 %v49
  %v196 = vunpack.c.l.b16 %v50
  %v197 = vunpack.c.l.b16 %v51
  %v198 = vunpack.c.l.b16 %v52
  %v199 = vunpack.c.l.b16 %v53
  %v200 = vunpack.c.l.b16 %v54
  %v201 = vunpack.c.l.b16 %v55
  %v202 = vunpack.c.l.b16 %v56
  %v203 = vunpack.c.l.b16 %v57
  %v204 = vunpack.c.l.b16 %v58
  %v205 = vunpack.c.l.b16 %v59
  %v206 = vunpack.c.l.b16 %v60
  %v207 = vunpack.c.l.b16 %v61
  %v208 = vunpack.c.l.b16 %v62
  %v209 = vunpack.c.l.b16 %v63
  %v210 = vunpack.c.l.b16 %v64
  %v211 = vunpack.c.l.b16 %v65
  %v212 = vunpack.c.l.b16 %v66
  %v213 = vunpack.c.l.b16 %v67
  %v214 = vunpack.c.l.b16 %v68
  %v215 = vunpack.c.l.b16 %v69
  %v216 = vunpack.c.l.b16 %v70
  %v217 = vunpack.c.l.b16 %v71
  %v218 = vunpack.c.l.b16 %v72
  %v219 = vunpack.c.l.b16 %v73
  %v220 = vunpack.c.l.b16 %v74
  %v221 = vunpack.c.l.b16 %v75
  %v222 = vunpack.c.l.b16 %v76
  %v223 = vunpack.c.l.b16 %v77
  %v224 = vunpack.c.l.b16 %v78
  %v225 = vunpack.c.l.b16 %v79
  %v226 = vunpack.c.l.b16 %v80
  %v227 = vunpack.c.l.b16 %v81
  %v228 = vunpack.c.l.b16 %v82
  %v229 = vunpack.c.l.b16 %v83
  %v230 = vunpack.c.l.b16 %v84
  %v231 = vunpack.c.l.b16 %v85
  %v232 = vpack.c.b16 %v169, %v168
  %v233 = vpack.c.b16 %v171, %v170
  %v234 = vpack.c.b16 %v173, %v172
  %v235 = vpack.c.b16 %v175, %v174
  %v236 = vpack.c.b16 %v177, %v176
  %v237 = vpack.c.b16 %v179, %v178
  %v238 = vpack.c.b16 %v181, %v180
  %v239 = vpack.c.b16 %v183, %v182
  %v240 = vpack.c.b16 %v185, %v184
  %v241 = vpack.c.b16 %v187, %v186
  %v242 = vpack.c.b16 %v189, %v188
  %v243 = vpack.c.b16 %v191, %v190
  %v244 = vpack.c.b16 %v193, %v192
  %v245 = vpack.c.b16 %v195, %v194
  %v246 = vpack.c.b16 %v197, %v196
  %v247 = vpack.c.b16 %v199, %v198
  %v248 = vpack.c.b16 %v201, %v200
  %v249 = vpack.c.b16 %v203, %v202
  %v250 = vpack.c.b16 %v205, %v204
  %v251 = vpack.c.b16 %v207, %v206
  %v252 = vpack.c.b16 %v209, %v208
  %v253 = vpack.c.b16 %v211, %v210
  %v254 = vpack.c.b16 %v213, %v212
  %v255 = vpack.c.b16 %v215, %v214
  %v256 = vpack.c.b16 %v217, %v216
  %v257 = vpack.c.b16 %v219, %v218
  %v258 = vpack.c.b16 %v221, %v220
  %v259 = vpack.c.b16 %v223, %v222
  %v260 = vpack.c.b16 %v225, %v224
  %v261 = vpack.c.b16 %v227, %v226
  %v262 = vpack.c.b16 %v229, %v228
  %v263 = vpack.c.b16 %v231, %v230
  %296 = vmatpush.bf16.msra.mxu0 %v239
  %297 = vmatpush.bf16.msra.mxu0 %v238
  %298 = vmatpush.bf16.msra.mxu0 %v237
  %299 = vmatpush.bf16.msra.mxu0 %v236
  %300 = vmatpush.bf16.msra.mxu0 %v235
  %301 = vmatpush.bf16.msra.mxu0 %v234
  %302 = vmatpush.bf16.msra.mxu0 %v233
  %303 = vmatpush.bf16.msra.mxu0 %v232
  %304 = vmatmul.bf16.gmra.mxu0 %v96
  %v305 = vpop.f32.mrf.mxu0
  %v306 = vadd.f32 %v88, %v305
  %v307 = vpop.f32.mrf.mxu0
  %308 = vdwg.mxu0
  %309 = vmatpush.bf16.msra.mxu0 %v247
  %310 = vmatpush.bf16.msra.mxu0 %v246
  %311 = vmatpush.bf16.msra.mxu0 %v245
  %312 = vmatpush.bf16.msra.mxu0 %v244
  %313 = vmatpush.bf16.msra.mxu0 %v243
  %314 = vmatpush.bf16.msra.mxu0 %v242
  %315 = vmatpush.bf16.msra.mxu0 %v241
  %316 = vmatpush.bf16.msra.mxu0 %v240
  %317 = vmatmul.bf16.gmra.mxu0 %v97
  %v318 = vpop.f32.mrf.mxu0
  %v319 = vadd.f32 %v306, %v318
  %v320 = vpop.f32.mrf.mxu0
  %321 = vdwg.mxu0
  %322 = vmatpush.bf16.msra.mxu0 %v255
  %323 = vmatpush.bf16.msra.mxu0 %v254
  %324 = vmatpush.bf16.msra.mxu0 %v253
  %325 = vmatpush.bf16.msra.mxu0 %v252
  %326 = vmatpush.bf16.msra.mxu0 %v251
  %327 = vmatpush.bf16.msra.mxu0 %v250
  %328 = vmatpush.bf16.msra.mxu0 %v249
  %329 = vmatpush.bf16.msra.mxu0 %v248
  %330 = vmatmul.bf16.gmra.mxu0 %v98
  %v331 = vpop.f32.mrf.mxu0
  %v332 = vadd.f32 %v319, %v331
  %v333 = vpop.f32.mrf.mxu0
  %334 = vdwg.mxu0
  %335 = vmatpush.bf16.msra.mxu0 %v263
  %336 = vmatpush.bf16.msra.mxu0 %v262
  %337 = vmatpush.bf16.msra.mxu0 %v261
  %338 = vmatpush.bf16.msra.mxu0 %v260
  %339 = vmatpush.bf16.msra.mxu0 %v259
  %340 = vmatpush.bf16.msra.mxu0 %v258
  %341 = vmatpush.bf16.msra.mxu0 %v257
  %342 = vmatpush.bf16.msra.mxu0 %v256
  %343 = vmatmul.bf16.gmra.mxu0 %v99
  %v344 = vpop.f32.mrf.mxu0
  %v345 = vadd.f32 %v332, %v344
  %v346 = vpop.f32.mrf.mxu0
  %347 = vdwg.mxu0
  %v348 = vmax.f32 %v345, 0.0
  %v349 = vpack.c.bf16 %v348, %v348
  %v350 = vld [vmem:[%s3] sm:$0xf]
  %v351 = vld [vmem:[%s3 + $0x4] sm:$0xf]
  %v352 = vld [vmem:[%s3 + $0x8] sm:$0xf]
  %v353 = vld [vmem:[%s3 + $0xc] sm:$0xf]
  %v354 = vld [vmem:[%s3 + $0x10] sm:$0xf]
  %v355 = vld [vmem:[%s3 + $0x14] sm:$0xf]
  %v356 = vld [vmem:[%s3 + $0x18] sm:$0xf]
  %v357 = vld [vmem:[%s3 + $0x1c] sm:$0xf]
  %v358 = vld [vmem:[%s3 + $0x20] sm:$0xf]
  %v359 = vld [vmem:[%s3 + $0x24] sm:$0xf]
  %v360 = vld [vmem:[%s3 + $0x28] sm:$0xf]
  %v361 = vld [vmem:[%s3 + $0x2c] sm:$0xf]
  %v362 = vld [vmem:[%s3 + $0x30] sm:$0xf]
  %v363 = vld [vmem:[%s3 + $0x34] sm:$0xf]
  %v364 = vld [vmem:[%s3 + $0x38] sm:$0xf]
  %v365 = vld [vmem:[%s3 + $0x3c] sm:$0xf]
  %v366 = vld [vmem:[%s4] sm:$0x1]
  %v368 = vperm.slane %v366, 0
  %v386 = vunpack.c.l.b16 %v350
  %v387 = vunpack.c.l.b16 %v351
  %v388 = vunpack.c.l.b16 %v352
  %v389 = vunpack.c.l.b16 %v353
  %v390 = vunpack.c.l.b16 %v354
  %v391 = vunpack.c.l.b16 %v355
  %v392 = vunpack.c.l.b16 %v356
  %v393 = vunpack.c.l.b16 %v357
  %v394 = vunpack.c.l.b16 %v358
  %v395 = vunpack.c.l.b16 %v359
  %v396 = vunpack.c.l.b16 %v360
  %v397 = vunpack.c.l.b16 %v361
  %v398 = vunpack.c.l.b16 %v362
  %v399 = vunpack.c.l.b16 %v363
  %v400 = vunpack.c.l.b16 %v364
  %v401 = vunpack.c.l.b16 %v365
  %v402 = vpack.c.b16 %v387, %v386
  %v403 = vpack.c.b16 %v389, %v388
  %v404 = vpack.c.b16 %v391, %v390
  %v405 = vpack.c.b16 %v393, %v392
  %v406 = vpack.c.b16 %v395, %v394
  %v407 = vpack.c.b16 %v397, %v396
  %v408 = vpack.c.b16 %v399, %v398
  %v409 = vpack.c.b16 %v401, %v400
  %418 = vmatpush.bf16.msra.mxu0 %v409
  %419 = vmatpush.bf16.msra.mxu0 %v408
  %420 = vmatpush.bf16.msra.mxu0 %v407
  %421 = vmatpush.bf16.msra.mxu0 %v406
  %422 = vmatpush.bf16.msra.mxu0 %v405
  %423 = vmatpush.bf16.msra.mxu0 %v404
  %424 = vmatpush.bf16.msra.mxu0 %v403
  %425 = vmatpush.bf16.msra.mxu0 %v402
  %426 = vmatmul.bf16.gmra.mxu0 %v349
  %v427 = vpop.f32.mrf.mxu0
  %v428 = vadd.f32 %v368, %v427
  %v429 = vpop.f32.mrf.mxu0
  %430 = vdwg.mxu0
  %431 = vst [vmem:[%s5] sm:$0xff] %v428
  // Predicated region
  $region22: #{email_classifier_forward.1} parent=0 // pred_check
    _
  $region23: #{email_classifier_forward.1} parent=0 // pred_check_branch
    %433 = sbr.rel (0) target = $region25
  $region24: #{email_classifier_forward.1} parent=0 // pred_region
    _
  $region25: #{email_classifier_forward.1} parent=0 // pred_fallthru
    _
  // Predicated region
  $region26: #{email_classifier_forward.1} parent=0 // pred_check
    _
  $region27: #{email_classifier_forward.1} parent=0 // pred_check_branch
    %435 = sbr.rel (0) target = $region29
  $region28: #{email_classifier_forward.1} parent=0 // pred_region
    _
  $region29: #{email_classifier_forward.1} parent=0 // pred_fallthru
    _

</llo_original>
